<compile_context>
chip_gen: v7x
topology: tpu7x:2x2x1
jax: 0.10.0
libtpu: 0.0.40
codegen_flags: <defaults>
</compile_context>

<pallas_src>
import functools

import jax
import jax.numpy as jnp
from jax.experimental import pallas as pl
from jax.experimental.pallas import tpu as pltpu


def _round_up(x, m):
    return pl.cdiv(x, m) * m


# --------------------------------------------------------------------------
# Pallas kernel: full MLP (+ optional residual) for one tile of rows.
# x is pre-masked in the wrapper; matmuls run bf16 x bf16 -> f32 on the MXU,
# bias/ReLU in f32 on the VPU.
# --------------------------------------------------------------------------
def _mlp_kernel(num_hidden_layers, is_residual, *refs):
    # refs = (x_ref, w0, b0, ..., w_{L-1}, b_{L-1}, w_out, [w_res,] b_fused, out_ref)
    x_ref = refs[0]
    out_ref = refs[-1]
    p = refs[1:-1]

    x = x_ref[...]                      # (rows, S*F) bf16, already masked
    h = x
    k = 0
    for _ in range(num_hidden_layers):
        w = p[k][...]                   # (d_in, H) bf16
        b = p[k + 1][...]               # (1, H)    f32
        k += 2
        a = jnp.dot(h, w, preferred_element_type=jnp.float32) + b
        h = jnp.maximum(a, 0.0).astype(jnp.bfloat16)

    # Output layer (+ residual branch); biases were pre-fused in the wrapper.
    out = jnp.dot(h, p[k][...], preferred_element_type=jnp.float32)
    k += 1
    if is_residual:
        out = out + jnp.dot(x, p[k][...], preferred_element_type=jnp.float32)
        k += 1
    out_ref[...] = (out + p[k][...]).astype(out_ref.dtype)


# --------------------------------------------------------------------------
# Wrapper: mask+flatten fused in XLA, row padding, bf16 param prep, pallas_call
# --------------------------------------------------------------------------
def map_encoder_forward(map_, mask_map, params, *, num_hidden_layers,
                        is_mlp_residual, row_tile=256):
    """Pallas implementation of MapEncoderNN.forward.

    map_:     (B, N, S, F) float32
    mask_map: (B, N, S)    bool
    params:   flat list [w0, b0, ..., w_out, b_out, (w_res, b_res)]
              weights are (in, out) f32, biases are (1, out) f32
    returns:  (B, N, H) float32
    """
    B, N, S, F = map_.shape
    D_in = S * F
    H = params[-1].shape[-1]
    M = B * N

    # Fuse mask-apply + flatten into the wrapper (single XLA elementwise op) so
    # only ONE (rows, S*F) array crosses HBM->VMEM, not input + broadcast mask.
    x = (map_.astype(jnp.float32)
         * mask_map[..., None].astype(jnp.float32)).reshape(M, D_in)

    # Row tiling: keep tiles in multiples of 128 rows (MXU geometry: 128 on
    # v5e, 256 on v6e/v7x), pad the tail instead of asserting divisibility.
    row_tile = int(max(128, min(row_tile, _round_up(M, 128))))
    M_pad = int(_round_up(M, row_tile))
    if M_pad != M:
        x = jnp.pad(x, ((0, M_pad - M), (0, 0)))
    x_bf16 = x.astype(jnp.bfloat16)     # bf16 matmul operands, f32 accumulate

    # Parameter prep: weights -> bf16, biases -> f32; fold output + residual
    # biases into a single vector added once at the end of the kernel.
    kparams = []
    idx = 0
    for _ in range(num_hidden_layers):
        w, b = params[idx], params[idx + 1]
        idx += 2
        kparams += [w.astype(jnp.bfloat16), b.astype(jnp.float32)]
    w_out, b_out = params[idx], params[idx + 1]
    idx += 2
    kparams.append(w_out.astype(jnp.bfloat16))
    b_fused = b_out.astype(jnp.float32)
    if is_mlp_residual:
        w_res, b_res = params[idx], params[idx + 1]
        kparams.append(w_res.astype(jnp.bfloat16))
        b_fused = b_fused + b_res.astype(jnp.float32)
    kparams.append(b_fused)

    grid = (M_pad // row_tile,)
    row_spec_in = pl.BlockSpec((row_tile, D_in), lambda i: (i, 0))
    row_spec_out = pl.BlockSpec((row_tile, H), lambda i: (i, 0))
    # Weights/biases: grid-invariant index_map -> stay resident, no per-step DMA.
    param_specs = [pl.BlockSpec(p.shape, lambda i: (0, 0)) for p in kparams]

    kernel = functools.partial(_mlp_kernel, num_hidden_layers, is_mlp_residual)

    out_flat = pl.pallas_call(
        kernel,
        out_shape=jax.ShapeDtypeStruct((M_pad, H), jnp.float32),
        grid_spec=pltpu.PrefetchScalarGridSpec(
            num_scalar_prefetch=0,
            grid=grid,
            in_specs=[row_spec_in] + param_specs,
            out_specs=row_spec_out,
        ),
        compiler_params=pltpu.CompilerParams(
            # Row tiles are independent -> shard across TensorCores (v7x).
            dimension_semantics=("parallel",),
        ),
    )(x_bf16, *kparams)

    return out_flat[:M].reshape(B, N, H)


# --------------------------------------------------------------------------
# Pure-JAX f32 reference (mirrors PyTorch SequenceEncoderMLP / MLP forward)
# --------------------------------------------------------------------------
def reference_forward(map_, mask_map, params, *, num_hidden_layers,
                      is_mlp_residual):
    B, N, S, F = map_.shape
    x = (map_ * mask_map[..., None].astype(map_.dtype)).reshape(B, N, S * F)
    idx = 0
    h = x
    for _ in range(num_hidden_layers):
        w, b = params[idx], params[idx + 1]
        idx += 2
        h = jax.nn.relu(h @ w + b[0])
    w, b = params[idx], params[idx + 1]
    idx += 2
    out = h @ w + b[0]
    if is_mlp_residual:
        wr, br = params[idx], params[idx + 1]
        out = out + x @ wr + br[0]
    return out


# --------------------------------------------------------------------------
# Deterministic parameter construction (PyTorch nn.Linear-style uniform init)
# --------------------------------------------------------------------------
def make_params(key, d_in, h_dim, num_hidden_layers, is_mlp_residual):
    params = []
    dims = [(d_in, h_dim)] + [(h_dim, h_dim)] * (num_hidden_layers - 1)
    dims += [(h_dim, h_dim)]          # output layer
    if is_mlp_residual:
        dims += [(d_in, h_dim)]       # residual layer
    for (fan_in, fan_out) in dims:
        key, kw, kb = jax.random.split(key, 3)
        bound = 1.0 / jnp.sqrt(fan_in)
        w = jax.random.uniform(kw, (fan_in, fan_out), jnp.float32, -bound, bound)
        b = jax.random.uniform(kb, (1, fan_out), jnp.float32, -bound, bound)
        params += [w, b]
    return params


if __name__ == "__main__":
    # CVAEParams-equivalent small config
    map_state_dim = 4        # F
    max_size_lane = 8        # S (object sequence length)
    hidden_dim = 32          # H
    num_hidden_layers = 2
    is_mlp_residual = True

    batch_size = 2
    num_objects = 8

    key = jax.random.PRNGKey(0)
    k_map, k_mask, k_par = jax.random.split(key, 3)

    map_in = jax.random.normal(
        k_map, (batch_size, num_objects, max_size_lane, map_state_dim),
        dtype=jnp.float32)
    mask_map = jax.random.bernoulli(
        k_mask, 0.7, (batch_size, num_objects, max_size_lane))

    params = make_params(
        k_par, max_size_lane * map_state_dim, hidden_dim,
        num_hidden_layers, is_mlp_residual)

    out = map_encoder_forward(
        map_in, mask_map, params,
        num_hidden_layers=num_hidden_layers,
        is_mlp_residual=is_mlp_residual)
    out = jax.block_until_ready(out)

    ref = reference_forward(
        map_in, mask_map, params,
        num_hidden_layers=num_hidden_layers,
        is_mlp_residual=is_mlp_residual)

    assert out.shape == (batch_size, num_objects, hidden_dim)
    # bf16 matmul operands (f32 accumulation) -> looser tolerance than pure f32.
    assert jnp.allclose(out, ref, atol=1e-1, rtol=1e-1), "mismatch vs reference"
    print("KERNEL_OK")
</pallas_src>

<mosaic_0001>
module attributes {stable_mosaic.version = 11 : i64} {
  func.func @_mlp_kernel(%arg0: i32, %arg1: memref<128x32xbf16, #tpu.memory_space<vmem>>, %arg2: memref<32x32xbf16, #tpu.memory_space<vmem>>, %arg3: memref<1x32xf32, #tpu.memory_space<vmem>>, %arg4: memref<32x32xbf16, #tpu.memory_space<vmem>>, %arg5: memref<1x32xf32, #tpu.memory_space<vmem>>, %arg6: memref<32x32xbf16, #tpu.memory_space<vmem>>, %arg7: memref<32x32xbf16, #tpu.memory_space<vmem>>, %arg8: memref<1x32xf32, #tpu.memory_space<vmem>>, %arg9: memref<128x32xf32, #tpu.memory_space<vmem>>) attributes {dimension_semantics = [#tpu.dimension_semantics<parallel>], iteration_bounds = array<i64: 1>, scalar_prefetch = 0 : i64, scratch_operands = 0 : i64, tpu.core_type = #tpu.core_type<tc>, window_params = [{transform_indices = @transform_0, window_bounds = array<i64: 128, 32>}, {pipeline_mode = #tpu.pipeline_mode<synchronous>, transform_indices = @transform_1, window_bounds = array<i64: 32, 32>}, {pipeline_mode = #tpu.pipeline_mode<synchronous>, transform_indices = @transform_2, window_bounds = array<i64: 1, 32>}, {pipeline_mode = #tpu.pipeline_mode<synchronous>, transform_indices = @transform_3, window_bounds = array<i64: 32, 32>}, {pipeline_mode = #tpu.pipeline_mode<synchronous>, transform_indices = @transform_4, window_bounds = array<i64: 1, 32>}, {pipeline_mode = #tpu.pipeline_mode<synchronous>, transform_indices = @transform_5, window_bounds = array<i64: 32, 32>}, {pipeline_mode = #tpu.pipeline_mode<synchronous>, transform_indices = @transform_6, window_bounds = array<i64: 32, 32>}, {pipeline_mode = #tpu.pipeline_mode<synchronous>, transform_indices = @transform_7, window_bounds = array<i64: 1, 32>}, {transform_indices = @transform_8, window_bounds = array<i64: 128, 32>}]} {
    %c0 = arith.constant 0 : index
    %c0_0 = arith.constant 0 : index
    %0 = vector.load %arg1[%c0, %c0_0] : memref<128x32xbf16, #tpu.memory_space<vmem>>, vector<128x32xbf16>
    %c0_1 = arith.constant 0 : index
    %c0_2 = arith.constant 0 : index
    %1 = vector.load %arg2[%c0_1, %c0_2] : memref<32x32xbf16, #tpu.memory_space<vmem>>, vector<32x32xbf16>
    %c0_3 = arith.constant 0 : index
    %c0_4 = arith.constant 0 : index
    %2 = vector.load %arg3[%c0_3, %c0_4] : memref<1x32xf32, #tpu.memory_space<vmem>>, vector<1x32xf32>
    %cst = arith.constant dense<0.000000e+00> : vector<128x32xf32>
    %3 = tpu.matmul %0, %1, %cst {dimension_numbers = #tpu.dot_dimension_numbers<[1], [0], [0], [1], [0, 0, 1, 1], [], []>} : vector<128x32xbf16>, vector<32x32xbf16>, vector<128x32xf32> -> vector<128x32xf32>
    %4 = vector.broadcast %2 : vector<1x32xf32> to vector<128x32xf32>
    %5 = arith.addf %3, %4 : vector<128x32xf32>
    %cst_5 = arith.constant 0.000000e+00 : f32
    %6 = vector.broadcast %cst_5 : f32 to vector<128x32xf32>
    %7 = arith.maximumf %5, %6 : vector<128x32xf32>
    %8 = arith.truncf %7 : vector<128x32xf32> to vector<128x32xbf16>
    %c0_6 = arith.constant 0 : index
    %c0_7 = arith.constant 0 : index
    %9 = vector.load %arg4[%c0_6, %c0_7] : memref<32x32xbf16, #tpu.memory_space<vmem>>, vector<32x32xbf16>
    %c0_8 = arith.constant 0 : index
    %c0_9 = arith.constant 0 : index
    %10 = vector.load %arg5[%c0_8, %c0_9] : memref<1x32xf32, #tpu.memory_space<vmem>>, vector<1x32xf32>
    %cst_10 = arith.constant dense<0.000000e+00> : vector<128x32xf32>
    %11 = tpu.matmul %8, %9, %cst_10 {dimension_numbers = #tpu.dot_dimension_numbers<[1], [0], [0], [1], [0, 0, 1, 1], [], []>} : vector<128x32xbf16>, vector<32x32xbf16>, vector<128x32xf32> -> vector<128x32xf32>
    %12 = vector.broadcast %10 : vector<1x32xf32> to vector<128x32xf32>
    %13 = arith.addf %11, %12 : vector<128x32xf32>
    %cst_11 = arith.constant 0.000000e+00 : f32
    %14 = vector.broadcast %cst_11 : f32 to vector<128x32xf32>
    %15 = arith.maximumf %13, %14 : vector<128x32xf32>
    %16 = arith.truncf %15 : vector<128x32xf32> to vector<128x32xbf16>
    %c0_12 = arith.constant 0 : index
    %c0_13 = arith.constant 0 : index
    %17 = vector.load %arg6[%c0_12, %c0_13] : memref<32x32xbf16, #tpu.memory_space<vmem>>, vector<32x32xbf16>
    %cst_14 = arith.constant dense<0.000000e+00> : vector<128x32xf32>
    %18 = tpu.matmul %16, %17, %cst_14 {dimension_numbers = #tpu.dot_dimension_numbers<[1], [0], [0], [1], [0, 0, 1, 1], [], []>} : vector<128x32xbf16>, vector<32x32xbf16>, vector<128x32xf32> -> vector<128x32xf32>
    %c0_15 = arith.constant 0 : index
    %c0_16 = arith.constant 0 : index
    %19 = vector.load %arg7[%c0_15, %c0_16] : memref<32x32xbf16, #tpu.memory_space<vmem>>, vector<32x32xbf16>
    %cst_17 = arith.constant dense<0.000000e+00> : vector<128x32xf32>
    %20 = tpu.matmul %0, %19, %cst_17 {dimension_numbers = #tpu.dot_dimension_numbers<[1], [0], [0], [1], [0, 0, 1, 1], [], []>} : vector<128x32xbf16>, vector<32x32xbf16>, vector<128x32xf32> -> vector<128x32xf32>
    %21 = arith.addf %18, %20 : vector<128x32xf32>
    %c0_18 = arith.constant 0 : index
    %c0_19 = arith.constant 0 : index
    %22 = vector.load %arg8[%c0_18, %c0_19] : memref<1x32xf32, #tpu.memory_space<vmem>>, vector<1x32xf32>
    %23 = vector.broadcast %22 : vector<1x32xf32> to vector<128x32xf32>
    %24 = arith.addf %21, %23 : vector<128x32xf32>
    %c0_20 = arith.constant 0 : index
    %c0_21 = arith.constant 0 : index
    %25 = vector.load %arg9[%c0_20, %c0_21] : memref<128x32xf32, #tpu.memory_space<vmem>>, vector<128x32xf32>
    tpu.vector_store %arg9[%c0_20, %c0_21], %24 {strides = array<i32>} : memref<128x32xf32, #tpu.memory_space<vmem>>, vector<128x32xf32>,
    return
  }
  func.func @transform_0(%arg0: i32) -> (i32, i32) {
    %c0_i32 = arith.constant 0 : i32
    %c0_i32_0 = arith.constant 0 : i32
    return %arg0, %c0_i32 : i32, i32
  }
  func.func @transform_1(%arg0: i32) -> (i32, i32) {
    %c0_i32 = arith.constant 0 : i32
    %c0_i32_0 = arith.constant 0 : i32
    %c0_i32_1 = arith.constant 0 : i32
    return %c0_i32, %c0_i32_0 : i32, i32
  }
  func.func @transform_2(%arg0: i32) -> (i32, i32) {
    %c0_i32 = arith.constant 0 : i32
    %c0_i32_0 = arith.constant 0 : i32
    %c0_i32_1 = arith.constant 0 : i32
    return %c0_i32, %c0_i32_0 : i32, i32
  }
  func.func @transform_3(%arg0: i32) -> (i32, i32) {
    %c0_i32 = arith.constant 0 : i32
    %c0_i32_0 = arith.constant 0 : i32
    %c0_i32_1 = arith.constant 0 : i32
    return %c0_i32, %c0_i32_0 : i32, i32
  }
  func.func @transform_4(%arg0: i32) -> (i32, i32) {
    %c0_i32 = arith.constant 0 : i32
    %c0_i32_0 = arith.constant 0 : i32
    %c0_i32_1 = arith.constant 0 : i32
    return %c0_i32, %c0_i32_0 : i32, i32
  }
  func.func @transform_5(%arg0: i32) -> (i32, i32) {
    %c0_i32 = arith.constant 0 : i32
    %c0_i32_0 = arith.constant 0 : i32
    %c0_i32_1 = arith.constant 0 : i32
    return %c0_i32, %c0_i32_0 : i32, i32
  }
  func.func @transform_6(%arg0: i32) -> (i32, i32) {
    %c0_i32 = arith.constant 0 : i32
    %c0_i32_0 = arith.constant 0 : i32
    %c0_i32_1 = arith.constant 0 : i32
    return %c0_i32, %c0_i32_0 : i32, i32
  }
  func.func @transform_7(%arg0: i32) -> (i32, i32) {
    %c0_i32 = arith.constant 0 : i32
    %c0_i32_0 = arith.constant 0 : i32
    %c0_i32_1 = arith.constant 0 : i32
    return %c0_i32, %c0_i32_0 : i32, i32
  }
  func.func @transform_8(%arg0: i32) -> (i32, i32) {
    %c0_i32 = arith.constant 0 : i32
    %c0_i32_0 = arith.constant 0 : i32
    return %arg0, %c0_i32 : i32, i32
  }
}

</mosaic_0001>

<llo_original>
// kernel: tpu_custom_call.1
$region0: #{tpu_custom_call.1}
  #allocation0 [shape = 'u32[]', space=smem, size = 0x4, offset = 0x4, fixed_abs, tag = 'smem constant byte address 0x4 - core index']
  #allocation1 [shape = 'u32[144,128]{1,0:T(1,128)}', space=vmem, size = 0x12000, scoped, tag = 'internal scratch']
  %s0 = inlined_call_operand.vmem [shape: bf16[128,32], index: 0, kind: input, shape index: {}]
  %s1 = inlined_call_operand.vmem [shape: bf16[32,32], index: 1, kind: input, shape index: {}]
  %s2 = inlined_call_operand.vmem [shape: f32[1,32], index: 2, kind: input, shape index: {}]
  %s3 = inlined_call_operand.vmem [shape: bf16[32,32], index: 3, kind: input, shape index: {}]
  %s4 = inlined_call_operand.vmem [shape: f32[1,32], index: 4, kind: input, shape index: {}]
  %s5 = inlined_call_operand.vmem [shape: bf16[32,32], index: 5, kind: input, shape index: {}]
  %s6 = inlined_call_operand.vmem [shape: bf16[32,32], index: 6, kind: input, shape index: {}]
  %s7 = inlined_call_operand.vmem [shape: f32[1,32], index: 7, kind: input, shape index: {}]
  %s8 = inlined_call_operand.vmem [shape: f32[128,32], index: 8, kind: output, shape index: {}]
  %s9 = sld [smem:[#allocation0]]
  $region42: #{tpu_custom_call.1} parent=0
    _
  %s11 = ssub.s32 1, %s9
  %s12 = scalar_select 0, %s11, %s9
  // Predicated region
  $region2: #{tpu_custom_call.1} parent=0 // pred_check
    _
  $region3: #{tpu_custom_call.1} parent=0 // pred_check_branch
    %14 = sbr.rel (0) target = $region5
  $region4: #{tpu_custom_call.1} parent=0 // pred_region
    _
  $region5: #{tpu_custom_call.1} parent=0 // pred_fallthru
    _
  // Predicated region
  $region6: #{tpu_custom_call.1} parent=0 // pred_check
    _
  $region7: #{tpu_custom_call.1} parent=0 // pred_check_branch
    %16 = sbr.rel (0) target = $region9
  $region8: #{tpu_custom_call.1} parent=0 // pred_region
    _
  $region9: #{tpu_custom_call.1} parent=0 // pred_fallthru
    _
  // Predicated region
  $region10: #{tpu_custom_call.1} parent=0 // pred_check
    _
  $region11: #{tpu_custom_call.1} parent=0 // pred_check_branch
    %18 = sbr.rel (0) target = $region13
  $region12: #{tpu_custom_call.1} parent=0 // pred_region
    _
  $region13: #{tpu_custom_call.1} parent=0 // pred_fallthru
    _
  // Predicated region
  $region14: #{tpu_custom_call.1} parent=0 // pred_check
    _
  $region15: #{tpu_custom_call.1} parent=0 // pred_check_branch
    %20 = sbr.rel (0) target = $region17
  $region16: #{tpu_custom_call.1} parent=0 // pred_region
    _
  $region17: #{tpu_custom_call.1} parent=0 // pred_fallthru
    _
  // Predicated region
  $region18: #{tpu_custom_call.1} parent=0 // pred_check
    _
  $region19: #{tpu_custom_call.1} parent=0 // pred_check_branch
    %22 = sbr.rel (0) target = $region21
  $region20: #{tpu_custom_call.1} parent=0 // pred_region
    _
  $region21: #{tpu_custom_call.1} parent=0 // pred_fallthru
    _
  // Predicated region
  $region22: #{tpu_custom_call.1} parent=0 // pred_check
    _
  $region23: #{tpu_custom_call.1} parent=0 // pred_check_branch
    %24 = sbr.rel (0) target = $region25
  $region24: #{tpu_custom_call.1} parent=0 // pred_region
    _
  $region25: #{tpu_custom_call.1} parent=0 // pred_fallthru
    _
  // Predicated region
  $region26: #{tpu_custom_call.1} parent=0 // pred_check
    _
  $region27: #{tpu_custom_call.1} parent=0 // pred_check_branch
    %26 = sbr.rel (0) target = $region29
  $region28: #{tpu_custom_call.1} parent=0 // pred_region
    _
  $region29: #{tpu_custom_call.1} parent=0 // pred_fallthru
    _
  // Predicated region
  $region30: #{tpu_custom_call.1} parent=0 // pred_check
    _
  $region31: #{tpu_custom_call.1} parent=0 // pred_check_branch
    %28 = sbr.rel (0) target = $region33
  $region32: #{tpu_custom_call.1} parent=0 // pred_region
    _
  $region33: #{tpu_custom_call.1} parent=0 // pred_fallthru
    _
  %v30 = vld [vmem:[%s0] sm:$0xf]
  %v31 = vld [vmem:[%s0 + $0x4] sm:$0xf]
  %v32 = vld [vmem:[%s0 + $0x8] sm:$0xf]
  %v33 = vld [vmem:[%s0 + $0xc] sm:$0xf]
  %v34 = vld [vmem:[%s0 + $0x10] sm:$0xf]
  %v35 = vld [vmem:[%s0 + $0x14] sm:$0xf]
  %v36 = vld [vmem:[%s0 + $0x18] sm:$0xf]
  %v37 = vld [vmem:[%s0 + $0x1c] sm:$0xf]
  %v38 = vld [vmem:[%s0 + $0x20] sm:$0xf]
  %v39 = vld [vmem:[%s0 + $0x24] sm:$0xf]
  %v40 = vld [vmem:[%s0 + $0x28] sm:$0xf]
  %v41 = vld [vmem:[%s0 + $0x2c] sm:$0xf]
  %v42 = vld [vmem:[%s0 + $0x30] sm:$0xf]
  %v43 = vld [vmem:[%s0 + $0x34] sm:$0xf]
  %v44 = vld [vmem:[%s0 + $0x38] sm:$0xf]
  %v45 = vld [vmem:[%s0 + $0x3c] sm:$0xf]
  %v46 = vld [vmem:[%s1] sm:$0xf]
  %v47 = vld [vmem:[%s1 + $0x4] sm:$0xf]
  %v48 = vld [vmem:[%s1 + $0x8] sm:$0xf]
  %v49 = vld [vmem:[%s1 + $0xc] sm:$0xf]
  %v50 = vld [vmem:[%s2] sm:$0x1]
  %v52 = vlaneseq
  %v53 = vshrl.u32 %v52, 7
  %v54 = vsub.s32 0, %v53
  %v55 = vrot.slane %v50, %v54
  %v73 = vunpack.c.l.b16 %v30
  %v74 = vunpack.c.l.b16 %v31
  %v75 = vunpack.c.l.b16 %v32
  %v76 = vunpack.c.l.b16 %v33
  %v77 = vunpack.c.l.b16 %v34
  %v78 = vunpack.c.l.b16 %v35
  %v79 = vunpack.c.l.b16 %v36
  %v80 = vunpack.c.l.b16 %v37
  %v81 = vunpack.c.l.b16 %v38
  %v82 = vunpack.c.l.b16 %v39
  %v83 = vunpack.c.l.b16 %v40
  %v84 = vunpack.c.l.b16 %v41
  %v85 = vunpack.c.l.b16 %v42
  %v86 = vunpack.c.l.b16 %v43
  %v87 = vunpack.c.l.b16 %v44
  %v88 = vunpack.c.l.b16 %v45
  %v89 = vpack.c.b16 %v74, %v73
  %v90 = vpack.c.b16 %v76, %v75
  %v91 = vpack.c.b16 %v78, %v77
  %v92 = vpack.c.b16 %v80, %v79
  %v93 = vpack.c.b16 %v82, %v81
  %v94 = vpack.c.b16 %v84, %v83
  %v95 = vpack.c.b16 %v86, %v85
  %v96 = vpack.c.b16 %v88, %v87
  %v101 = vunpack.c.l.b16 %v46
  %v102 = vunpack.c.l.b16 %v47
  %v103 = vunpack.c.l.b16 %v48
  %v104 = vunpack.c.l.b16 %v49
  %v105 = vpack.c.b16 %v102, %v101
  %v106 = vpack.c.b16 %v104, %v103
  %vm109 = vcmask 261120
  %v111 = vsel %vm109, %v89, 0
  %v114 = vsel %vm109, %v90, 0
  %v117 = vsel %vm109, %v91, 0
  %v120 = vsel %vm109, %v92, 0
  %v123 = vsel %vm109, %v93, 0
  %v126 = vsel %vm109, %v94, 0
  %v129 = vsel %vm109, %v95, 0
  %v132 = vsel %vm109, %v96, 0
  %134 = vmatprep.subr.bf16.mxu0 0
  %135 = vmatpush1.bf16.msra.mxu0 %v105
  %136 = vmatprep.subr.bf16.mxu0 0
  %137 = vmatpush1.bf16.msra.mxu0 %v106
  %138 = vmatprep.subr.bf16.mxu0 0
  %139 = vmatpush1.bf16.msra.mxu0 0
  %140 = vmatprep.subr.bf16.mxu0 0
  %141 = vmatpush1.bf16.msra.mxu0 0
  %142 = vmatprep.subr.bf16.mxu0 0
  %143 = vmatpush1.bf16.msra.mxu0 0
  %144 = vmatprep.subr.bf16.mxu0 0
  %145 = vmatpush1.bf16.msra.mxu0 0
  %146 = vmatprep.subr.bf16.mxu0 0
  %147 = vmatpush1.bf16.msra.mxu0 0
  %148 = vmatprep.subr.bf16.mxu0 0
  %149 = vmatpush1.bf16.msra.mxu0 0
  %150 = vmatprep.subr.bf16.mxu0 0
  %151 = vmatpush1.bf16.msra.mxu0 0
  %152 = vmatprep.subr.bf16.mxu0 0
  %153 = vmatpush1.bf16.msra.mxu0 0
  %154 = vmatprep.subr.bf16.mxu0 0
  %155 = vmatpush1.bf16.msra.mxu0 0
  %156 = vmatprep.subr.bf16.mxu0 0
  %157 = vmatpush1.bf16.msra.mxu0 0
  %158 = vmatprep.subr.bf16.mxu0 0
  %159 = vmatpush1.bf16.msra.mxu0 0
  %160 = vmatprep.subr.bf16.mxu0 0
  %161 = vmatpush1.bf16.msra.mxu0 0
  %162 = vmatprep.subr.bf16.mxu0 0
  %163 = vmatpush1.bf16.msra.mxu0 0
  %164 = vmatprep.subr.bf16.mxu0 0
  %165 = vmatpush1.bf16.msra.mxu0 0
  %166 = vmatprep.mubr.bf16.mxu0 0
  %167 = vmatmul.mubr.bf16.gmra.mrb[0].mxu0 %v111
  %v168 = vpop.f32.mrb[0].mxu0
  %v169 = vadd.f32 %v55, %v168
  %v170 = vpop.f32.mrb[0].mxu0
  %v171 = vpop.f32.mrb[0].mxu0
  %v172 = vadd.f32 %v55, %v171
  %v173 = vpop.f32.mrb[0].mxu0
  %174 = vmatprep.mubr.bf16.mxu0 0
  %175 = vmatmul.mubr.bf16.gmra.mrb[0].mxu0 %v114
  %v176 = vpop.f32.mrb[0].mxu0
  %v177 = vadd.f32 %v55, %v176
  %v178 = vpop.f32.mrb[0].mxu0
  %v179 = vpop.f32.mrb[0].mxu0
  %v180 = vadd.f32 %v55, %v179
  %v181 = vpop.f32.mrb[0].mxu0
  %182 = vmatprep.mubr.bf16.mxu0 0
  %183 = vmatmul.mubr.bf16.gmra.mrb[0].mxu0 %v117
  %v184 = vpop.f32.mrb[0].mxu0
  %v185 = vadd.f32 %v55, %v184
  %v186 = vpop.f32.mrb[0].mxu0
  %v187 = vpop.f32.mrb[0].mxu0
  %v188 = vadd.f32 %v55, %v187
  %v189 = vpop.f32.mrb[0].mxu0
  %190 = vmatprep.mubr.bf16.mxu0 0
  %191 = vmatmul.mubr.bf16.gmra.mrb[0].mxu0 %v120
  %v192 = vpop.f32.mrb[0].mxu0
  %v193 = vadd.f32 %v55, %v192
  %v194 = vpop.f32.mrb[0].mxu0
  %v195 = vpop.f32.mrb[0].mxu0
  %v196 = vadd.f32 %v55, %v195
  %v197 = vpop.f32.mrb[0].mxu0
  %198 = vmatprep.mubr.bf16.mxu0 0
  %199 = vmatmul.mubr.bf16.gmra.mrb[0].mxu0 %v123
  %v200 = vpop.f32.mrb[0].mxu0
  %v201 = vadd.f32 %v55, %v200
  %v202 = vpop.f32.mrb[0].mxu0
  %v203 = vpop.f32.mrb[0].mxu0
  %v204 = vadd.f32 %v55, %v203
  %v205 = vpop.f32.mrb[0].mxu0
  %206 = vmatprep.mubr.bf16.mxu0 0
  %207 = vmatmul.mubr.bf16.gmra.mrb[0].mxu0 %v126
  %v208 = vpop.f32.mrb[0].mxu0
  %v209 = vadd.f32 %v55, %v208
  %v210 = vpop.f32.mrb[0].mxu0
  %v211 = vpop.f32.mrb[0].mxu0
  %v212 = vadd.f32 %v55, %v211
  %v213 = vpop.f32.mrb[0].mxu0
  %214 = vmatprep.mubr.bf16.mxu0 0
  %215 = vmatmul.mubr.bf16.gmra.mrb[0].mxu0 %v129
  %v216 = vpop.f32.mrb[0].mxu0
  %v217 = vadd.f32 %v55, %v216
  %v218 = vpop.f32.mrb[0].mxu0
  %v219 = vpop.f32.mrb[0].mxu0
  %v220 = vadd.f32 %v55, %v219
  %v221 = vpop.f32.mrb[0].mxu0
  %222 = vmatprep.mubr.bf16.mxu0 0
  %223 = vmatmul.mubr.bf16.gmra.mrb[0].mxu0 %v132
  %v224 = vpop.f32.mrb[0].mxu0
  %v225 = vadd.f32 %v55, %v224
  %v226 = vpop.f32.mrb[0].mxu0
  %v227 = vpop.f32.mrb[0].mxu0
  %v228 = vadd.f32 %v55, %v227
  %v229 = vpop.f32.mrb[0].mxu0
  %230 = vdwg.mxu0
  %v231 = vmax.f32 %v169, 0.0
  %v232 = vmax.f32 %v172, 0.0
  %v233 = vmax.f32 %v177, 0.0
  %v234 = vmax.f32 %v180, 0.0
  %v235 = vmax.f32 %v185, 0.0
  %v236 = vmax.f32 %v188, 0.0
  %v237 = vmax.f32 %v193, 0.0
  %v238 = vmax.f32 %v196, 0.0
  %v239 = vmax.f32 %v201, 0.0
  %v240 = vmax.f32 %v204, 0.0
  %v241 = vmax.f32 %v209, 0.0
  %v242 = vmax.f32 %v212, 0.0
  %v243 = vmax.f32 %v217, 0.0
  %v244 = vmax.f32 %v220, 0.0
  %v245 = vmax.f32 %v225, 0.0
  %v246 = vmax.f32 %v228, 0.0
  %v247 = vpack.c.bf16 %v232, %v231
  %v248 = vpack.c.bf16 %v234, %v233
  %v249 = vpack.c.bf16 %v236, %v235
  %v250 = vpack.c.bf16 %v238, %v237
  %v251 = vpack.c.bf16 %v240, %v239
  %v252 = vpack.c.bf16 %v242, %v241
  %v253 = vpack.c.bf16 %v244, %v243
  %v254 = vpack.c.bf16 %v246, %v245
  %v255 = vld [vmem:[%s3] sm:$0xf]
  %v256 = vld [vmem:[%s3 + $0x4] sm:$0xf]
  %v257 = vld [vmem:[%s3 + $0x8] sm:$0xf]
  %v258 = vld [vmem:[%s3 + $0xc] sm:$0xf]
  %v259 = vld [vmem:[%s4] sm:$0x1]
  %v261 = vlaneseq
  %v262 = vshrl.u32 %v261, 7
  %v263 = vsub.s32 0, %v262
  %v264 = vrot.slane %v259, %v263
  %v270 = vunpack.c.l.b16 %v255
  %v271 = vunpack.c.l.b16 %v256
  %v272 = vunpack.c.l.b16 %v257
  %v273 = vunpack.c.l.b16 %v258
  %v274 = vpack.c.b16 %v271, %v270
  %v275 = vpack.c.b16 %v273, %v272
  %v279 = vsel %vm109, %v247, 0
  %v282 = vsel %vm109, %v248, 0
  %v285 = vsel %vm109, %v249, 0
  %v288 = vsel %vm109, %v250, 0
  %v291 = vsel %vm109, %v251, 0
  %v294 = vsel %vm109, %v252, 0
  %v297 = vsel %vm109, %v253, 0
  %v300 = vsel %vm109, %v254, 0
  %302 = vmatprep.subr.bf16.mxu0 0
  %303 = vmatpush1.bf16.msra.mxu0 %v274
  %304 = vmatprep.subr.bf16.mxu0 0
  %305 = vmatpush1.bf16.msra.mxu0 %v275
  %306 = vmatprep.subr.bf16.mxu0 0
  %307 = vmatpush1.bf16.msra.mxu0 0
  %308 = vmatprep.subr.bf16.mxu0 0
  %309 = vmatpush1.bf16.msra.mxu0 0
  %310 = vmatprep.subr.bf16.mxu0 0
  %311 = vmatpush1.bf16.msra.mxu0 0
  %312 = vmatprep.subr.bf16.mxu0 0
  %313 = vmatpush1.bf16.msra.mxu0 0
  %314 = vmatprep.subr.bf16.mxu0 0
  %315 = vmatpush1.bf16.msra.mxu0 0
  %316 = vmatprep.subr.bf16.mxu0 0
  %317 = vmatpush1.bf16.msra.mxu0 0
  %318 = vmatprep.subr.bf16.mxu0 0
  %319 = vmatpush1.bf16.msra.mxu0 0
  %320 = vmatprep.subr.bf16.mxu0 0
  %321 = vmatpush1.bf16.msra.mxu0 0
  %322 = vmatprep.subr.bf16.mxu0 0
  %323 = vmatpush1.bf16.msra.mxu0 0
  %324 = vmatprep.subr.bf16.mxu0 0
  %325 = vmatpush1.bf16.msra.mxu0 0
  %326 = vmatprep.subr.bf16.mxu0 0
  %327 = vmatpush1.bf16.msra.mxu0 0
  %328 = vmatprep.subr.bf16.mxu0 0
  %329 = vmatpush1.bf16.msra.mxu0 0
  %330 = vmatprep.subr.bf16.mxu0 0
  %331 = vmatpush1.bf16.msra.mxu0 0
  %332 = vmatprep.subr.bf16.mxu0 0
  %333 = vmatpush1.bf16.msra.mxu0 0
  %334 = vmatprep.mubr.bf16.mxu0 0
  %335 = vmatmul.mubr.bf16.gmra.mrb[0].mxu0 %v279
  %v336 = vpop.f32.mrb[0].mxu0
  %v337 = vadd.f32 %v264, %v336
  %v338 = vpop.f32.mrb[0].mxu0
  %v339 = vpop.f32.mrb[0].mxu0
  %v340 = vadd.f32 %v264, %v339
  %v341 = vpop.f32.mrb[0].mxu0
  %342 = vmatprep.mubr.bf16.mxu0 0
  %343 = vmatmul.mubr.bf16.gmra.mrb[0].mxu0 %v282
  %v344 = vpop.f32.mrb[0].mxu0
  %v345 = vadd.f32 %v264, %v344
  %v346 = vpop.f32.mrb[0].mxu0
  %v347 = vpop.f32.mrb[0].mxu0
  %v348 = vadd.f32 %v264, %v347
  %v349 = vpop.f32.mrb[0].mxu0
  %350 = vmatprep.mubr.bf16.mxu0 0
  %351 = vmatmul.mubr.bf16.gmra.mrb[0].mxu0 %v285
  %v352 = vpop.f32.mrb[0].mxu0
  %v353 = vadd.f32 %v264, %v352
  %v354 = vpop.f32.mrb[0].mxu0
  %v355 = vpop.f32.mrb[0].mxu0
  %v356 = vadd.f32 %v264, %v355
  %v357 = vpop.f32.mrb[0].mxu0
  %358 = vmatprep.mubr.bf16.mxu0 0
  %359 = vmatmul.mubr.bf16.gmra.mrb[0].mxu0 %v288
  %v360 = vpop.f32.mrb[0].mxu0
  %v361 = vadd.f32 %v264, %v360
  %v362 = vpop.f32.mrb[0].mxu0
  %v363 = vpop.f32.mrb[0].mxu0
  %v364 = vadd.f32 %v264, %v363
  %v365 = vpop.f32.mrb[0].mxu0
  %366 = vmatprep.mubr.bf16.mxu0 0
  %367 = vmatmul.mubr.bf16.gmra.mrb[0].mxu0 %v291
  %v368 = vpop.f32.mrb[0].mxu0
  %v369 = vadd.f32 %v264, %v368
  %v370 = vpop.f32.mrb[0].mxu0
  %v371 = vpop.f32.mrb[0].mxu0
  %v372 = vadd.f32 %v264, %v371
  %v373 = vpop.f32.mrb[0].mxu0
  %374 = vmatprep.mubr.bf16.mxu0 0
  %375 = vmatmul.mubr.bf16.gmra.mrb[0].mxu0 %v294
  %v376 = vpop.f32.mrb[0].mxu0
  %v377 = vadd.f32 %v264, %v376
  %v378 = vpop.f32.mrb[0].mxu0
  %v379 = vpop.f32.mrb[0].mxu0
  %v380 = vadd.f32 %v264, %v379
  %v381 = vpop.f32.mrb[0].mxu0
  %382 = vmatprep.mubr.bf16.mxu0 0
  %383 = vmatmul.mubr.bf16.gmra.mrb[0].mxu0 %v297
  %v384 = vpop.f32.mrb[0].mxu0
  %v385 = vadd.f32 %v264, %v384
  %v386 = vpop.f32.mrb[0].mxu0
  %v387 = vpop.f32.mrb[0].mxu0
  %v388 = vadd.f32 %v264, %v387
  %v389 = vpop.f32.mrb[0].mxu0
  %390 = vmatprep.mubr.bf16.mxu0 0
  %391 = vmatmul.mubr.bf16.gmra.mrb[0].mxu0 %v300
  %v392 = vpop.f32.mrb[0].mxu0
  %v393 = vadd.f32 %v264, %v392
  %v394 = vpop.f32.mrb[0].mxu0
  %v395 = vpop.f32.mrb[0].mxu0
  %v396 = vadd.f32 %v264, %v395
  %v397 = vpop.f32.mrb[0].mxu0
  %398 = vdwg.mxu0
  %v399 = vmax.f32 %v337, 0.0
  %v400 = vmax.f32 %v340, 0.0
  %v401 = vmax.f32 %v345, 0.0
  %v402 = vmax.f32 %v348, 0.0
  %v403 = vmax.f32 %v353, 0.0
  %v404 = vmax.f32 %v356, 0.0
  %v405 = vmax.f32 %v361, 0.0
  %v406 = vmax.f32 %v364, 0.0
  %v407 = vmax.f32 %v369, 0.0
  %v408 = vmax.f32 %v372, 0.0
  %v409 = vmax.f32 %v377, 0.0
  %v410 = vmax.f32 %v380, 0.0
  %v411 = vmax.f32 %v385, 0.0
  %v412 = vmax.f32 %v388, 0.0
  %v413 = vmax.f32 %v393, 0.0
  %v414 = vmax.f32 %v396, 0.0
  %v415 = vpack.c.bf16 %v400, %v399
  %v416 = vpack.c.bf16 %v402, %v401
  %v417 = vpack.c.bf16 %v404, %v403
  %v418 = vpack.c.bf16 %v406, %v405
  %v419 = vpack.c.bf16 %v408, %v407
  %v420 = vpack.c.bf16 %v410, %v409
  %v421 = vpack.c.bf16 %v412, %v411
  %v422 = vpack.c.bf16 %v414, %v413
  %v423 = vld [vmem:[%s5] sm:$0xf]
  %v424 = vld [vmem:[%s5 + $0x4] sm:$0xf]
  %v425 = vld [vmem:[%s5 + $0x8] sm:$0xf]
  %v426 = vld [vmem:[%s5 + $0xc] sm:$0xf]
  %v427 = vld [vmem:[%s6] sm:$0xf]
  %v428 = vld [vmem:[%s6 + $0x4] sm:$0xf]
  %v429 = vld [vmem:[%s6 + $0x8] sm:$0xf]
  %v430 = vld [vmem:[%s6 + $0xc] sm:$0xf]
  %v435 = vunpack.c.l.b16 %v427
  %v436 = vunpack.c.l.b16 %v428
  %v437 = vunpack.c.l.b16 %v429
  %v438 = vunpack.c.l.b16 %v430
  %v439 = vpack.c.b16 %v436, %v435
  %v440 = vpack.c.b16 %v438, %v437
  %443 = vmatprep.subr.bf16.mxu0 0
  %444 = vmatpush1.bf16.msra.mxu0 %v439
  %445 = vmatprep.subr.bf16.mxu0 0
  %446 = vmatpush1.bf16.msra.mxu0 %v440
  %447 = vmatprep.subr.bf16.mxu0 0
  %448 = vmatpush1.bf16.msra.mxu0 0
  %449 = vmatprep.subr.bf16.mxu0 0
  %450 = vmatpush1.bf16.msra.mxu0 0
  %451 = vmatprep.subr.bf16.mxu0 0
  %452 = vmatpush1.bf16.msra.mxu0 0
  %453 = vmatprep.subr.bf16.mxu0 0
  %454 = vmatpush1.bf16.msra.mxu0 0
  %455 = vmatprep.subr.bf16.mxu0 0
  %456 = vmatpush1.bf16.msra.mxu0 0
  %457 = vmatprep.subr.bf16.mxu0 0
  %458 = vmatpush1.bf16.msra.mxu0 0
  %459 = vmatprep.subr.bf16.mxu0 0
  %460 = vmatpush1.bf16.msra.mxu0 0
  %461 = vmatprep.subr.bf16.mxu0 0
  %462 = vmatpush1.bf16.msra.mxu0 0
  %463 = vmatprep.subr.bf16.mxu0 0
  %464 = vmatpush1.bf16.msra.mxu0 0
  %465 = vmatprep.subr.bf16.mxu0 0
  %466 = vmatpush1.bf16.msra.mxu0 0
  %467 = vmatprep.subr.bf16.mxu0 0
  %468 = vmatpush1.bf16.msra.mxu0 0
  %469 = vmatprep.subr.bf16.mxu0 0
  %470 = vmatpush1.bf16.msra.mxu0 0
  %471 = vmatprep.subr.bf16.mxu0 0
  %472 = vmatpush1.bf16.msra.mxu0 0
  %473 = vmatprep.subr.bf16.mxu0 0
  %474 = vmatpush1.bf16.msra.mxu0 0
  %475 = vmatprep.mubr.bf16.mxu0 0
  %476 = vmatmul.mubr.bf16.gmra.mrb[0].mxu0 %v111
  %v477 = vpop.f32.mrb[0].mxu0
  %v478 = vadd.f32 0.0, %v477
  %v479 = vpop.f32.mrb[0].mxu0
  %v480 = vpop.f32.mrb[0].mxu0
  %v481 = vadd.f32 0.0, %v480
  %v482 = vpop.f32.mrb[0].mxu0
  %483 = vmatprep.mubr.bf16.mxu0 0
  %484 = vmatmul.mubr.bf16.gmra.mrb[0].mxu0 %v114
  %v485 = vpop.f32.mrb[0].mxu0
  %v486 = vadd.f32 0.0, %v485
  %v487 = vpop.f32.mrb[0].mxu0
  %v488 = vpop.f32.mrb[0].mxu0
  %v489 = vadd.f32 0.0, %v488
  %v490 = vpop.f32.mrb[0].mxu0
  %491 = vmatprep.mubr.bf16.mxu0 0
  %492 = vmatmul.mubr.bf16.gmra.mrb[0].mxu0 %v117
  %v493 = vpop.f32.mrb[0].mxu0
  %v494 = vadd.f32 0.0, %v493
  %v495 = vpop.f32.mrb[0].mxu0
  %v496 = vpop.f32.mrb[0].mxu0
  %v497 = vadd.f32 0.0, %v496
  %v498 = vpop.f32.mrb[0].mxu0
  %499 = vmatprep.mubr.bf16.mxu0 0
  %500 = vmatmul.mubr.bf16.gmra.mrb[0].mxu0 %v120
  %v501 = vpop.f32.mrb[0].mxu0
  %v502 = vadd.f32 0.0, %v501
  %v503 = vpop.f32.mrb[0].mxu0
  %v504 = vpop.f32.mrb[0].mxu0
  %v505 = vadd.f32 0.0, %v504
  %v506 = vpop.f32.mrb[0].mxu0
  %507 = vmatprep.mubr.bf16.mxu0 0
  %508 = vmatmul.mubr.bf16.gmra.mrb[0].mxu0 %v123
  %v509 = vpop.f32.mrb[0].mxu0
  %v510 = vadd.f32 0.0, %v509
  %v511 = vpop.f32.mrb[0].mxu0
  %v512 = vpop.f32.mrb[0].mxu0
  %v513 = vadd.f32 0.0, %v512
  %v514 = vpop.f32.mrb[0].mxu0
  %515 = vmatprep.mubr.bf16.mxu0 0
  %516 = vmatmul.mubr.bf16.gmra.mrb[0].mxu0 %v126
  %v517 = vpop.f32.mrb[0].mxu0
  %v518 = vadd.f32 0.0, %v517
  %v519 = vpop.f32.mrb[0].mxu0
  %v520 = vpop.f32.mrb[0].mxu0
  %v521 = vadd.f32 0.0, %v520
  %v522 = vpop.f32.mrb[0].mxu0
  %523 = vmatprep.mubr.bf16.mxu0 0
  %524 = vmatmul.mubr.bf16.gmra.mrb[0].mxu0 %v129
  %v525 = vpop.f32.mrb[0].mxu0
  %v526 = vadd.f32 0.0, %v525
  %v527 = vpop.f32.mrb[0].mxu0
  %v528 = vpop.f32.mrb[0].mxu0
  %v529 = vadd.f32 0.0, %v528
  %v530 = vpop.f32.mrb[0].mxu0
  %531 = vmatprep.mubr.bf16.mxu0 0
  %532 = vmatmul.mubr.bf16.gmra.mrb[0].mxu0 %v132
  %v533 = vpop.f32.mrb[0].mxu0
  %v534 = vadd.f32 0.0, %v533
  %v535 = vpop.f32.mrb[0].mxu0
  %v536 = vpop.f32.mrb[0].mxu0
  %v537 = vadd.f32 0.0, %v536
  %v538 = vpop.f32.mrb[0].mxu0
  %539 = vdwg.mxu0
  %v544 = vunpack.c.l.b16 %v423
  %v545 = vunpack.c.l.b16 %v424
  %v546 = vunpack.c.l.b16 %v425
  %v547 = vunpack.c.l.b16 %v426
  %v548 = vpack.c.b16 %v545, %v544
  %v549 = vpack.c.b16 %v547, %v546
  %v553 = vsel %vm109, %v415, 0
  %v556 = vsel %vm109, %v416, 0
  %v559 = vsel %vm109, %v417, 0
  %v562 = vsel %vm109, %v418, 0
  %v565 = vsel %vm109, %v419, 0
  %v568 = vsel %vm109, %v420, 0
  %v571 = vsel %vm109, %v421, 0
  %v574 = vsel %vm109, %v422, 0
  %576 = vmatprep.subr.bf16.mxu0 0
  %577 = vmatpush1.bf16.msra.mxu0 %v548
  %578 = vmatprep.subr.bf16.mxu0 0
  %579 = vmatpush1.bf16.msra.mxu0 %v549
  %580 = vmatprep.subr.bf16.mxu0 0
  %581 = vmatpush1.bf16.msra.mxu0 0
  %582 = vmatprep.subr.bf16.mxu0 0
  %583 = vmatpush1.bf16.msra.mxu0 0
  %584 = vmatprep.subr.bf16.mxu0 0
  %585 = vmatpush1.bf16.msra.mxu0 0
  %586 = vmatprep.subr.bf16.mxu0 0
  %587 = vmatpush1.bf16.msra.mxu0 0
  %588 = vmatprep.subr.bf16.mxu0 0
  %589 = vmatpush1.bf16.msra.mxu0 0
  %590 = vmatprep.subr.bf16.mxu0 0
  %591 = vmatpush1.bf16.msra.mxu0 0
  %592 = vmatprep.subr.bf16.mxu0 0
  %593 = vmatpush1.bf16.msra.mxu0 0
  %594 = vmatprep.subr.bf16.mxu0 0
  %595 = vmatpush1.bf16.msra.mxu0 0
  %596 = vmatprep.subr.bf16.mxu0 0
  %597 = vmatpush1.bf16.msra.mxu0 0
  %598 = vmatprep.subr.bf16.mxu0 0
  %599 = vmatpush1.bf16.msra.mxu0 0
  %600 = vmatprep.subr.bf16.mxu0 0
  %601 = vmatpush1.bf16.msra.mxu0 0
  %602 = vmatprep.subr.bf16.mxu0 0
  %603 = vmatpush1.bf16.msra.mxu0 0
  %604 = vmatprep.subr.bf16.mxu0 0
  %605 = vmatpush1.bf16.msra.mxu0 0
  %606 = vmatprep.subr.bf16.mxu0 0
  %607 = vmatpush1.bf16.msra.mxu0 0
  %608 = vmatprep.mubr.bf16.mxu0 0
  %609 = vmatmul.mubr.bf16.gmra.mrb[0].mxu0 %v553
  %v610 = vpop.f32.mrb[0].mxu0
  %v611 = vadd.f32 %v478, %v610
  %v612 = vpop.f32.mrb[0].mxu0
  %v613 = vpop.f32.mrb[0].mxu0
  %v614 = vadd.f32 %v481, %v613
  %v615 = vpop.f32.mrb[0].mxu0
  %616 = vmatprep.mubr.bf16.mxu0 0
  %617 = vmatmul.mubr.bf16.gmra.mrb[0].mxu0 %v556
  %v618 = vpop.f32.mrb[0].mxu0
  %v619 = vadd.f32 %v486, %v618
  %v620 = vpop.f32.mrb[0].mxu0
  %v621 = vpop.f32.mrb[0].mxu0
  %v622 = vadd.f32 %v489, %v621
  %v623 = vpop.f32.mrb[0].mxu0
  %624 = vmatprep.mubr.bf16.mxu0 0
  %625 = vmatmul.mubr.bf16.gmra.mrb[0].mxu0 %v559
  %v626 = vpop.f32.mrb[0].mxu0
  %v627 = vadd.f32 %v494, %v626
  %v628 = vpop.f32.mrb[0].mxu0
  %v629 = vpop.f32.mrb[0].mxu0
  %v630 = vadd.f32 %v497, %v629
  %v631 = vpop.f32.mrb[0].mxu0
  %632 = vmatprep.mubr.bf16.mxu0 0
  %633 = vmatmul.mubr.bf16.gmra.mrb[0].mxu0 %v562
  %v634 = vpop.f32.mrb[0].mxu0
  %v635 = vadd.f32 %v502, %v634
  %v636 = vpop.f32.mrb[0].mxu0
  %v637 = vpop.f32.mrb[0].mxu0
  %v638 = vadd.f32 %v505, %v637
  %v639 = vpop.f32.mrb[0].mxu0
  %640 = vmatprep.mubr.bf16.mxu0 0
  %641 = vmatmul.mubr.bf16.gmra.mrb[0].mxu0 %v565
  %v642 = vpop.f32.mrb[0].mxu0
  %v643 = vadd.f32 %v510, %v642
  %v644 = vpop.f32.mrb[0].mxu0
  %v645 = vpop.f32.mrb[0].mxu0
  %v646 = vadd.f32 %v513, %v645
  %v647 = vpop.f32.mrb[0].mxu0
  %648 = vmatprep.mubr.bf16.mxu0 0
  %649 = vmatmul.mubr.bf16.gmra.mrb[0].mxu0 %v568
  %v650 = vpop.f32.mrb[0].mxu0
  %v651 = vadd.f32 %v518, %v650
  %v652 = vpop.f32.mrb[0].mxu0
  %v653 = vpop.f32.mrb[0].mxu0
  %v654 = vadd.f32 %v521, %v653
  %v655 = vpop.f32.mrb[0].mxu0
  %656 = vmatprep.mubr.bf16.mxu0 0
  %657 = vmatmul.mubr.bf16.gmra.mrb[0].mxu0 %v571
  %v658 = vpop.f32.mrb[0].mxu0
  %v659 = vadd.f32 %v526, %v658
  %v660 = vpop.f32.mrb[0].mxu0
  %v661 = vpop.f32.mrb[0].mxu0
  %v662 = vadd.f32 %v529, %v661
  %v663 = vpop.f32.mrb[0].mxu0
  %664 = vmatprep.mubr.bf16.mxu0 0
  %665 = vmatmul.mubr.bf16.gmra.mrb[0].mxu0 %v574
  %v666 = vpop.f32.mrb[0].mxu0
  %v667 = vadd.f32 %v534, %v666
  %v668 = vpop.f32.mrb[0].mxu0
  %v669 = vpop.f32.mrb[0].mxu0
  %v670 = vadd.f32 %v537, %v669
  %v671 = vpop.f32.mrb[0].mxu0
  %672 = vdwg.mxu0
  %v673 = vld [vmem:[%s7] sm:$0x1]
  %v675 = vlaneseq
  %v676 = vshrl.u32 %v675, 7
  %v677 = vsub.s32 0, %v676
  %v678 = vrot.slane %v673, %v677
  %v680 = vadd.f32 %v611, %v678
  %v681 = vadd.f32 %v614, %v678
  %v682 = vadd.f32 %v619, %v678
  %v683 = vadd.f32 %v622, %v678
  %v684 = vadd.f32 %v627, %v678
  %v685 = vadd.f32 %v630, %v678
  %v686 = vadd.f32 %v635, %v678
  %v687 = vadd.f32 %v638, %v678
  %v688 = vadd.f32 %v643, %v678
  %v689 = vadd.f32 %v646, %v678
  %v690 = vadd.f32 %v651, %v678
  %v691 = vadd.f32 %v654, %v678
  %v692 = vadd.f32 %v659, %v678
  %v693 = vadd.f32 %v662, %v678
  %v694 = vadd.f32 %v667, %v678
  %v695 = vadd.f32 %v670, %v678
  %696 = vst.msk [vmem:[%s8] sm:$0xff] %vm109, %v680
  %697 = vst.msk [vmem:[%s8 + $0x8] sm:$0xff] %vm109, %v681
  %698 = vst.msk [vmem:[%s8 + $0x10] sm:$0xff] %vm109, %v682
  %699 = vst.msk [vmem:[%s8 + $0x18] sm:$0xff] %vm109, %v683
  %700 = vst.msk [vmem:[%s8 + $0x20] sm:$0xff] %vm109, %v684
  %701 = vst.msk [vmem:[%s8 + $0x28] sm:$0xff] %vm109, %v685
  %702 = vst.msk [vmem:[%s8 + $0x30] sm:$0xff] %vm109, %v686
  %703 = vst.msk [vmem:[%s8 + $0x38] sm:$0xff] %vm109, %v687
  %704 = vst.msk [vmem:[%s8 + $0x40] sm:$0xff] %vm109, %v688
  %705 = vst.msk [vmem:[%s8 + $0x48] sm:$0xff] %vm109, %v689
  %706 = vst.msk [vmem:[%s8 + $0x50] sm:$0xff] %vm109, %v690
  %707 = vst.msk [vmem:[%s8 + $0x58] sm:$0xff] %vm109, %v691
  %708 = vst.msk [vmem:[%s8 + $0x60] sm:$0xff] %vm109, %v692
  %709 = vst.msk [vmem:[%s8 + $0x68] sm:$0xff] %vm109, %v693
  %710 = vst.msk [vmem:[%s8 + $0x70] sm:$0xff] %vm109, %v694
  %711 = vst.msk [vmem:[%s8 + $0x78] sm:$0xff] %vm109, %v695
  // Predicated region
  $region34: #{tpu_custom_call.1} parent=0 // pred_check
    _
  $region35: #{tpu_custom_call.1} parent=0 // pred_check_branch
    %713 = sbr.rel (0) target = $region37
  $region36: #{tpu_custom_call.1} parent=0 // pred_region
    _
  $region37: #{tpu_custom_call.1} parent=0 // pred_fallthru
    _
  // Predicated region
  $region38: #{tpu_custom_call.1} parent=0 // pred_check
    _
  $region39: #{tpu_custom_call.1} parent=0 // pred_check_branch
    %715 = sbr.rel (0) target = $region41
  $region40: #{tpu_custom_call.1} parent=0 // pred_region
    _
  $region41: #{tpu_custom_call.1} parent=0 // pred_fallthru
    _

</llo_original>
